<compile_context>
chip_gen: v7x
topology: tpu7x:2x2x1
jax: 0.10.0
libtpu: 0.0.40
codegen_flags: <defaults>
</compile_context>

<pallas_src>
import jax
import jax.numpy as jnp
from jax.experimental import pallas as pl
from jax.experimental.pallas import tpu as pltpu


_LANES = 128            # vreg lane width: last dim of every block
_MAX_BLOCK_ROWS = 512   # 512*128*4 B = 256 KiB/block; 2x-buffered stays far under
                        # scoped VMEM on v5e (16 MiB) / v6e / v7x (32 MiB default)
_PAD_VALUE = -1e30      # softplus(-1e30) == 0 exactly in f32 -> padding adds 0


def _softplus_sum_kernel(z_ref, partial_ref):
    """Per-block partial sums of log(1 + exp(z)), z = -target * inputs.T.

    z_ref:       (block_rows, 128) f32 tile in VMEM.
    partial_ref: (1, 128) f32 per-lane partial sums (sublane reduction only;
                 the cheap cross-lane/cross-block reduction is done outside).
    """
    z = z_ref[...]
    # log(1 + exp(z)) == max(z, 0) + log(1 + exp(-|z|))   (exact, overflow-safe)
    sp = jnp.maximum(z, 0.0) + jnp.log(1.0 + jnp.exp(-jnp.abs(z)))
    partial_ref[...] = jnp.sum(sp, axis=0, keepdims=True)


@jax.jit
def logistic_loss(inputs, target):
    """Matches torch: mean(log(1 + exp(-target * inputs.t())))."""
    inputs = jnp.asarray(inputs, jnp.float32)
    target = jnp.asarray(target, jnp.float32)
    # torch `.t()` is a no-op for 1-D and a transpose for 2-D; `.T` matches both.
    z = -(target * inputs.T)            # same broadcasting as the torch code
    total = z.size

    # Lane-dense layout: (rows_padded, 128), rows_padded = num_blocks*block_rows.
    rows = pl.cdiv(total, _LANES)
    block_rows = min(_MAX_BLOCK_ROWS, pl.cdiv(rows, 8) * 8)
    num_blocks = pl.cdiv(rows, block_rows)
    rows_padded = num_blocks * block_rows
    pad = rows_padded * _LANES - total

    flat = jnp.pad(z.reshape(-1), (0, pad), constant_values=_PAD_VALUE)
    z2d = flat.reshape(rows_padded, _LANES)

    partial = pl.pallas_call(
        _softplus_sum_kernel,
        out_shape=jax.ShapeDtypeStruct((num_blocks, _LANES), jnp.float32),
        grid=(num_blocks,),
        in_specs=[pl.BlockSpec((block_rows, _LANES), lambda i: (i, 0))],
        out_specs=pl.BlockSpec((1, _LANES), lambda i: (i, 0)),
        compiler_params=pltpu.CompilerParams(
            dimension_semantics=("parallel",),      # v7x: shard grid over 2 TCs
            vmem_limit_bytes=16 * 1024 * 1024,      # explicit, safe on all gens
        ),
        cost_estimate=pl.CostEstimate(
            flops=5 * rows_padded * _LANES,
            transcendentals=2 * rows_padded * _LANES,
            bytes_accessed=rows_padded * _LANES * 4 + num_blocks * _LANES * 4,
        ),
    )(z2d)

    # Tiny (num_blocks, 128) reduction + mean in plain JAX.
    return jnp.sum(partial) / jnp.float32(total)


if __name__ == "__main__":
    key = jax.random.PRNGKey(0)
    k1, k2, k3, k4 = jax.random.split(key, 4)

    # Small case consistent with the module's use: (B, 1) scores, (B,) +/-1 labels.
    inputs_s = jax.random.normal(k1, (8, 1), dtype=jnp.float32)
    target_s = jnp.where(jax.random.bernoulli(k2, 0.5, (8,)), 1.0, -1.0).astype(jnp.float32)

    # Medium case: exercises the multi-block grid and the padding path.
    inputs_m = jax.random.normal(k3, (100, 700), dtype=jnp.float32)
    target_m = jnp.where(jax.random.bernoulli(k4, 0.5, (100,)), 1.0, -1.0).astype(jnp.float32)

    ok = True
    for inputs, target in ((inputs_s, target_s), (inputs_m, target_m)):
        out = jax.block_until_ready(logistic_loss(inputs, target))
        ref = jnp.mean(jnp.log(1.0 + jnp.exp(-target * inputs.T)))
        ok &= bool(jnp.isfinite(out))
        ok &= bool(jnp.abs(out - ref) <= 1e-5 * (1.0 + jnp.abs(ref)))
    assert ok
    print("KERNEL_OK")
</pallas_src>

<mosaic_0001>
module attributes {stable_mosaic.version = 11 : i64} {
  func.func @_softplus_sum_kernel(%arg0: i32, %arg1: memref<8x128xf32, #tpu.memory_space<vmem>>, %arg2: memref<1x128xf32, #tpu.memory_space<vmem>>) attributes {dimension_semantics = [#tpu.dimension_semantics<parallel>], iteration_bounds = array<i64: 1>, scalar_prefetch = 0 : i64, scratch_operands = 0 : i64, tpu.core_type = #tpu.core_type<tc>, window_params = [{transform_indices = @transform_0, window_bounds = array<i64: 8, 128>}, {transform_indices = @transform_1, window_bounds = array<i64: 1, 128>}]} {
    %c0 = arith.constant 0 : index
    %c0_0 = arith.constant 0 : index
    %0 = vector.load %arg1[%c0, %c0_0] : memref<8x128xf32, #tpu.memory_space<vmem>>, vector<8x128xf32>
    %cst = arith.constant 0.000000e+00 : f32
    %1 = vector.broadcast %cst : f32 to vector<8x128xf32>
    %2 = arith.maximumf %0, %1 : vector<8x128xf32>
    %3 = math.absf %0 : vector<8x128xf32>
    %cst_1 = arith.constant 0.000000e+00 : f32
    %4 = vector.broadcast %cst_1 : f32 to vector<8x128xf32>
    %5 = arith.subf %4, %3 : vector<8x128xf32>
    %6 = math.exp %5 : vector<8x128xf32>
    %cst_2 = arith.constant 1.000000e+00 : f32
    %7 = vector.broadcast %cst_2 : f32 to vector<8x128xf32>
    %8 = arith.addf %7, %6 : vector<8x128xf32>
    %9 = math.log %8 : vector<8x128xf32>
    %10 = arith.addf %2, %9 : vector<8x128xf32>
    %cst_3 = arith.constant dense<0.000000e+00> : vector<128xf32>
    %11 = vector.multi_reduction <add>, %10, %cst_3 [0] : vector<8x128xf32> to vector<128xf32>
    %12 = vector.shape_cast %11 : vector<128xf32> to vector<1x128xf32>
    %c0_4 = arith.constant 0 : index
    %c0_5 = arith.constant 0 : index
    %13 = vector.load %arg2[%c0_4, %c0_5] : memref<1x128xf32, #tpu.memory_space<vmem>>, vector<1x128xf32>
    tpu.vector_store %arg2[%c0_4, %c0_5], %12 {strides = array<i32>} : memref<1x128xf32, #tpu.memory_space<vmem>>, vector<1x128xf32>,
    return
  }
  func.func @transform_0(%arg0: i32) -> (i32, i32) {
    %c0_i32 = arith.constant 0 : i32
    %c0_i32_0 = arith.constant 0 : i32
    return %arg0, %c0_i32 : i32, i32
  }
  func.func @transform_1(%arg0: i32) -> (i32, i32) {
    %c0_i32 = arith.constant 0 : i32
    %c0_i32_0 = arith.constant 0 : i32
    return %arg0, %c0_i32 : i32, i32
  }
}

</mosaic_0001>

<llo_original>
// kernel: logistic_loss.1
$region0: #{logistic_loss.1}
  #allocation0 [shape = 'u32[]', space=smem, size = 0x4, offset = 0x4, fixed_abs, tag = 'smem constant byte address 0x4 - core index']
  #allocation1 [shape = 'u32[144,128]{1,0:T(1,128)}', space=vmem, size = 0x12000, scoped, tag = 'internal scratch']
  %s0 = inlined_call_operand.vmem [shape: f32[8,128], index: 0, kind: input, shape index: {}]
  %s1 = inlined_call_operand.vmem [shape: f32[1,128], index: 1, kind: output, shape index: {}]
  %s2 = sld [smem:[#allocation0]]
  $region14: #{logistic_loss.1} parent=0
    _
  %s4 = ssub.s32 1, %s2
  %s5 = scalar_select 0, %s4, %s2
  // Predicated region
  $region2: #{logistic_loss.1} parent=0 // pred_check
    _
  $region3: #{logistic_loss.1} parent=0 // pred_check_branch
    %7 = sbr.rel (0) target = $region5
  $region4: #{logistic_loss.1} parent=0 // pred_region
    _
  $region5: #{logistic_loss.1} parent=0 // pred_fallthru
    _
  %v8 = vld [vmem:[%s0] sm:$0xff]
  %v9 = vmax.f32 %v8, 0.0
  %v10 = vand.u32 2147483647, %v8
  %v11 = vsub.f32 0.0, %v10
  %v12 = vmul.f32 %v11, 1.442695
  %v13 = vpow.pop %v12
  %v14 = vadd.f32 %v13, 1.0
  %v15 = vlog2.pop %v14
  %v16 = vmul.f32 %v15, 0.6931472
  %v17 = vadd.f32 %v9, %v16
  %v18 = vrot.slane %v17, 4
  %v19 = vadd.f32 %v17, %v18
  %v20 = vrot.slane %v19, 2
  %v21 = vadd.f32 %v19, %v20
  %v22 = vrot.slane %v21, 1
  %v23 = vadd.f32 %v21, %v22
  %24 = vst [vmem:[%s1] sm:$0x1] %v23
  // Predicated region
  $region6: #{logistic_loss.1} parent=0 // pred_check
    _
  $region7: #{logistic_loss.1} parent=0 // pred_check_branch
    %26 = sbr.rel (0) target = $region9
  $region8: #{logistic_loss.1} parent=0 // pred_region
    _
  $region9: #{logistic_loss.1} parent=0 // pred_fallthru
    _
  // Predicated region
  $region10: #{logistic_loss.1} parent=0 // pred_check
    _
  $region11: #{logistic_loss.1} parent=0 // pred_check_branch
    %28 = sbr.rel (0) target = $region13
  $region12: #{logistic_loss.1} parent=0 // pred_region
    _
  $region13: #{logistic_loss.1} parent=0 // pred_fallthru
    _

</llo_original>
